<compile_context>
chip_gen: v6e
topology: v6e:2x2x1
jax: 0.10.0
libtpu: 0.0.40
codegen_flags: <defaults>
</compile_context>

<pallas_src>
import functools

import jax
import jax.numpy as jnp
from jax import lax
from jax.experimental import pallas as pl
from jax.experimental.pallas import tpu as pltpu

_LANE = 128
_SUB = 8
_CHUNK_ROWS = 1024                      # in-kernel compute chunk (0.5 MiB f32 temps)
_TARGET_TILE_BYTES = 4 * 1024 * 1024    # per-input DMA tile, native dtype
_MIN_KERNEL_ELEMS = 32768               # below this, plain jnp wins
_VMEM_LIMIT = 32 * 1024 * 1024


def _cdiv(a, b):
    return -(-a // b)


def _round_up(a, b):
    return _cdiv(a, b) * b


def _pick_kpart(chunk_rows):
    """Largest number (<=8) of independent (8,128) partial accumulators."""
    v = chunk_rows // _SUB
    for k in range(min(8, v), 0, -1):
        if v % k == 0:
            return k
    return 1


def _loss_f32(x, t):
    # diff^2 / (1 + exp(a*(c - diff))) == diff^2 * sigmoid(a*(diff - c))
    #                                  == diff^2 * (0.5 + 0.5*tanh(0.5*a*(diff - c)))
    # (the torch clamp at 50 is dead code: diff >= 0 => a*(c-diff) <= 2)
    diff = jnp.abs(x - t)
    return diff * diff * (0.5 + 0.5 * jnp.tanh(5.0 * (diff - 0.2)))


def _loss_jnp(x, t):
    """Plain-jnp loss (original exp formulation) for fallback / ragged tails."""
    a, c = 10.0, 0.2
    xf = x.astype(jnp.float32)
    tf = t.astype(jnp.float32)
    diff = jnp.abs(xf - tf)
    return diff * diff / (1.0 + jnp.exp(jnp.minimum(a * (c - diff), 50.0)))


def _shrinkage_reduce_kernel(x_ref, t_ref, o_ref, acc_ref, *,
                             rows, block_rows, chunk_rows, k_part,
                             scale, need_mask):
    j = pl.program_id(1)

    @pl.when(j == 0)
    def _():
        acc_ref[...] = jnp.zeros_like(acc_ref)

    n_chunks = block_rows // chunk_rows
    blk = pl.program_id(0) * pl.num_programs(1) + j

    def chunk_partial(ci):
        r0 = pl.multiple_of(ci * chunk_rows, chunk_rows)
        x = x_ref[pl.ds(r0, chunk_rows), :].astype(jnp.float32)
        t = t_ref[pl.ds(r0, chunk_rows), :].astype(jnp.float32)
        loss = _loss_f32(x, t)
        if need_mask:
            row = (blk * block_rows + ci * chunk_rows
                   + lax.broadcasted_iota(jnp.int32, (chunk_rows, _LANE), 0))
            loss = jnp.where(row < rows, loss, 0.0)
        # K independent vreg-shaped partials: the 4 VALU slots pipeline instead
        # of one serial dependent-add chain.
        return loss.reshape(-1, k_part, _SUB, _LANE).sum(axis=0)

    if n_chunks == 1:
        acc_ref[...] += chunk_partial(0)
    else:
        # Rolled loop bounds live f32 temporaries to one chunk.
        part = lax.fori_loop(
            0, n_chunks,
            lambda ci, carry: carry + chunk_partial(ci),
            jnp.zeros((k_part, _SUB, _LANE), jnp.float32))
        acc_ref[...] += part

    @pl.when(j == pl.num_programs(1) - 1)
    def _():
        o_ref[...] = (jnp.sum(acc_ref[...]) * scale).reshape(1, 1)


def _shrinkage_elementwise_kernel(x_ref, t_ref, o_ref):
    x = x_ref[...].astype(jnp.float32)
    t = t_ref[...].astype(jnp.float32)
    o_ref[...] = _loss_f32(x, t).astype(o_ref.dtype)


def shrinkage_loss(inp, target, reduction="mean", block_rows=None):
    """Pallas TPU forward of the PyTorch shrinkage_loss module.

    reduction: 'mean' | 'sum' (fully reduced in-kernel) | 'none'.
    Inputs stay in their native dtype in HBM; math is done in f32 in-kernel.
    """
    if reduction not in ("mean", "sum", "none"):
        raise ValueError(f"unknown reduction: {reduction!r}")
    assert inp.shape == target.shape
    n = int(inp.size)

    # Small-n fallback: launch + scalar plumbing would dominate.
    if n < _MIN_KERNEL_ELEMS:
        loss = _loss_jnp(inp, target)
        if reduction == "mean":
            return jnp.mean(loss)
        if reduction == "sum":
            return jnp.sum(loss)
        return loss.astype(inp.dtype)

    xf = inp.reshape(-1)
    tf = target.reshape(-1)
    n_main = (n // _LANE) * _LANE          # kernel works on this aligned prefix
    tail = n - n_main                      # <128 ragged tail handled with jnp
    rows = n_main // _LANE
    x2 = xf[:n_main].reshape(rows, _LANE)
    t2 = tf[:n_main].reshape(rows, _LANE)

    itemsize = jnp.dtype(inp.dtype).itemsize
    in_bytes = 2 * n_main * itemsize

    if reduction == "none":
        br = _round_up(min(4096, _round_up(rows, _SUB)), _SUB)
        nblocks = _cdiv(rows, br)
        out2 = pl.pallas_call(
            _shrinkage_elementwise_kernel,
            out_shape=jax.ShapeDtypeStruct((rows, _LANE), inp.dtype),
            grid_spec=pltpu.PrefetchScalarGridSpec(
                num_scalar_prefetch=0,
                grid=(nblocks,),
                in_specs=[pl.BlockSpec((br, _LANE), lambda i: (i, 0)),
                          pl.BlockSpec((br, _LANE), lambda i: (i, 0))],
                out_specs=pl.BlockSpec((br, _LANE), lambda i: (i, 0)),
            ),
            compiler_params=pltpu.CompilerParams(
                dimension_semantics=("parallel",),
                vmem_limit_bytes=_VMEM_LIMIT),
            cost_estimate=pl.CostEstimate(
                flops=6 * n_main, transcendentals=n_main,
                bytes_accessed=in_bytes + n_main * itemsize),
        )(x2, t2)
        flat = out2.reshape(-1)
        if tail:
            tail_loss = _loss_jnp(xf[n_main:], tf[n_main:]).astype(inp.dtype)
            flat = jnp.concatenate([flat, tail_loss])
        return flat.reshape(inp.shape)

    # ---- mean / sum: streaming in-kernel reduce ----
    if block_rows is None:
        block_rows = _TARGET_TILE_BYTES // (_LANE * itemsize)   # bytes -> rows
    block_rows = max(_SUB, min(int(block_rows), _round_up(rows, _SUB)))
    block_rows = _round_up(block_rows, _SUB)
    if block_rows > _CHUNK_ROWS:
        block_rows = (block_rows // _CHUNK_ROWS) * _CHUNK_ROWS  # chunk-tileable
    chunk_rows = min(_CHUNK_ROWS, block_rows)
    k_part = _pick_kpart(chunk_rows)

    nblocks = _cdiv(rows, block_rows)
    # Always engage both v7x TensorCores when there is >1 block: odd counts get
    # a phantom block (index clamped -> DMA elided, rows masked to zero).
    p_split = 2 if nblocks >= 2 else 1
    inner = _cdiv(nblocks, p_split)
    total_blocks = p_split * inner
    need_mask = rows != total_blocks * block_rows
    scale = 1.0 / float(n) if reduction == "mean" else 1.0

    kernel = functools.partial(
        _shrinkage_reduce_kernel,
        rows=rows, block_rows=block_rows, chunk_rows=chunk_rows,
        k_part=k_part, scale=scale, need_mask=need_mask)

    def idx(p, j, inner=inner, last=nblocks - 1):
        return (jnp.minimum(p * inner + j, last), 0)

    out = pl.pallas_call(
        kernel,
        out_shape=jax.ShapeDtypeStruct((p_split, 1), jnp.float32),
        grid_spec=pltpu.PrefetchScalarGridSpec(
            num_scalar_prefetch=0,
            grid=(p_split, inner),
            in_specs=[pl.BlockSpec((block_rows, _LANE), idx),
                      pl.BlockSpec((block_rows, _LANE), idx)],
            out_specs=pl.BlockSpec((1, 1), lambda p, j: (p, 0)),
            scratch_shapes=[pltpu.VMEM((k_part, _SUB, _LANE), jnp.float32)],
        ),
        compiler_params=pltpu.CompilerParams(
            dimension_semantics=("parallel", "arbitrary"),
            vmem_limit_bytes=_VMEM_LIMIT),
        cost_estimate=pl.CostEstimate(
            flops=6 * n_main, transcendentals=n_main,
            bytes_accessed=in_bytes + 8 * p_split),
    )(x2, t2)

    total = jnp.sum(out)                  # per-core partials, already scaled
    if tail:
        total = total + jnp.sum(_loss_jnp(xf[n_main:], tf[n_main:])) * scale
    return total


def _reference(inp, target, reduction="mean"):
    loss = _loss_jnp(inp, target)
    if reduction == "mean":
        return jnp.mean(loss)
    if reduction == "sum":
        return jnp.sum(loss)
    return loss


if __name__ == "__main__":
    key = jax.random.PRNGKey(0)
    k1, k2, k3, k4 = jax.random.split(key, 4)

    # Shape implied by the module usage (tiny -> plain-jnp fallback path).
    x = jax.random.normal(k1, (2, 4, 16, 16), dtype=jnp.float32)
    t = jax.random.normal(k2, (2, 4, 16, 16), dtype=jnp.float32)
    for red, atol in (("mean", 1e-6), ("sum", 1e-5), ("none", 1e-6)):
        got = jax.block_until_ready(shrinkage_loss(x, t, reduction=red))
        assert jnp.allclose(got, _reference(x, t, red), rtol=1e-5, atol=atol), red

    # Large enough to hit the Pallas kernel (single block per core).
    xl = jax.random.normal(k3, (8, 64, 64), dtype=jnp.float32)   # 32768 elems
    tl = jax.random.normal(k4, (8, 64, 64), dtype=jnp.float32)
    for red, atol in (("mean", 1e-6), ("sum", 1e-3), ("none", 1e-6)):
        got = jax.block_until_ready(shrinkage_loss(xl, tl, reduction=red))
        assert jnp.allclose(got, _reference(xl, tl, red), rtol=1e-5, atol=atol), red

    # Multi-block path: even split across the size-2 "parallel" axis.
    got = jax.block_until_ready(
        shrinkage_loss(xl, tl, reduction="mean", block_rows=64))
    assert jnp.allclose(got, _reference(xl, tl, "mean"), rtol=1e-5, atol=1e-6)

    # Bigger slab: in-kernel chunk loop + partial last block, and (block_rows
    # = 1024) an odd block count -> phantom block on the second core.
    xo = jax.random.normal(k1, (24, 128, 128), dtype=jnp.float32)  # rows = 3072
    to = jax.random.normal(k2, (24, 128, 128), dtype=jnp.float32)
    got = jax.block_until_ready(
        shrinkage_loss(xo, to, reduction="mean", block_rows=2048))
    assert jnp.allclose(got, _reference(xo, to, "mean"), rtol=1e-5, atol=1e-6)
    got = jax.block_until_ready(
        shrinkage_loss(xo, to, reduction="sum", block_rows=1024))
    assert jnp.allclose(got, _reference(xo, to, "sum"), rtol=2e-5, atol=1e-2)

    # Ragged element count: kernel on the 128-aligned prefix + jnp tail.
    xr = jax.random.normal(k3, (5, 99, 67), dtype=jnp.float32)     # 33165 elems
    tr = jax.random.normal(k4, (5, 99, 67), dtype=jnp.float32)
    for red, atol in (("mean", 1e-6), ("none", 1e-6)):
        got = jax.block_until_ready(shrinkage_loss(xr, tr, reduction=red))
        assert jnp.allclose(got, _reference(xr, tr, red), rtol=1e-5, atol=atol), red

    # bf16 inputs: native-dtype HBM traffic, f32 math in-kernel.
    xb = xl.astype(jnp.bfloat16)
    tb = tl.astype(jnp.bfloat16)
    got = jax.block_until_ready(shrinkage_loss(xb, tb, reduction="mean"))
    assert jnp.allclose(got, _reference(xb, tb, "mean"), rtol=1e-3, atol=1e-4)

    print("KERNEL_OK")
</pallas_src>

<mosaic_0001>
module attributes {stable_mosaic.version = 11 : i64} {
  func.func @_shrinkage_reduce_kernel(%arg0: i32, %arg1: i32, %arg2: memref<256x128xf32, #tpu.memory_space<vmem>>, %arg3: memref<256x128xf32, #tpu.memory_space<vmem>>, %arg4: memref<1x1xf32, #tpu.memory_space<vmem>>, %arg5: memref<8x8x128xf32, #tpu.memory_space<vmem>>) attributes {dimension_semantics = [#tpu.dimension_semantics<parallel>, #tpu.dimension_semantics<arbitrary>], iteration_bounds = array<i64: 1, 1>, scalar_prefetch = 0 : i64, scratch_operands = 1 : i64, tpu.core_type = #tpu.core_type<tc>, window_params = [{transform_indices = @transform_0, window_bounds = array<i64: 256, 128>}, {transform_indices = @transform_1, window_bounds = array<i64: 256, 128>}, {transform_indices = @transform_2, window_bounds = array<i64: 1, 1>}]} {
    %c0_i32 = arith.constant 0 : i32
    %0 = arith.cmpi eq, %arg1, %c0_i32 : i32
    %1 = arith.extui %0 : i1 to i32
    %c0_i32_0 = arith.constant 0 : i32
    %2 = arith.cmpi ne, %1, %c0_i32_0 : i32
    scf.if %2 {
      %cst_15 = arith.constant 0.000000e+00 : f32
      %29 = vector.broadcast %cst_15 : f32 to vector<8x8x128xf32>
      %c0_16 = arith.constant 0 : index
      %c0_17 = arith.constant 0 : index
      %c0_18 = arith.constant 0 : index
      %30 = vector.load %arg5[%c0_16, %c0_17, %c0_18] : memref<8x8x128xf32, #tpu.memory_space<vmem>>, vector<8x8x128xf32>
      tpu.vector_store %arg5[%c0_16, %c0_17, %c0_18], %29 {strides = array<i32>} : memref<8x8x128xf32, #tpu.memory_space<vmem>>, vector<8x8x128xf32>,
    } else {
    }
    %c0 = arith.constant 0 : index
    %c0_1 = arith.constant 0 : index
    %c0_2 = arith.constant 0 : index
    %3 = vector.load %arg5[%c0, %c0_1, %c0_2] : memref<8x8x128xf32, #tpu.memory_space<vmem>>, vector<8x8x128xf32>
    %c0_i32_3 = arith.constant 0 : i32
    %4 = tpu.assume_multiple %c0_i32_3, 256 : i32
    %5 = arith.index_cast %4 : i32 to index
    %c0_4 = arith.constant 0 : index
    %6 = vector.load %arg2[%5, %c0_4] : memref<256x128xf32, #tpu.memory_space<vmem>>, vector<256x128xf32>
    %7 = arith.index_cast %4 : i32 to index
    %c0_5 = arith.constant 0 : index
    %8 = vector.load %arg3[%7, %c0_5] : memref<256x128xf32, #tpu.memory_space<vmem>>, vector<256x128xf32>
    %9 = arith.subf %6, %8 : vector<256x128xf32>
    %10 = math.absf %9 : vector<256x128xf32>
    %11 = arith.mulf %10, %10 : vector<256x128xf32>
    %cst = arith.constant 2.000000e-01 : f32
    %12 = vector.broadcast %cst : f32 to vector<256x128xf32>
    %13 = arith.subf %10, %12 : vector<256x128xf32>
    %cst_6 = arith.constant 5.000000e+00 : f32
    %14 = vector.broadcast %cst_6 : f32 to vector<256x128xf32>
    %15 = arith.mulf %14, %13 : vector<256x128xf32>
    %16 = math.tanh %15 : vector<256x128xf32>
    %cst_7 = arith.constant 5.000000e-01 : f32
    %17 = vector.broadcast %cst_7 : f32 to vector<256x128xf32>
    %18 = arith.mulf %17, %16 : vector<256x128xf32>
    %cst_8 = arith.constant 5.000000e-01 : f32
    %19 = vector.broadcast %cst_8 : f32 to vector<256x128xf32>
    %20 = arith.addf %19, %18 : vector<256x128xf32>
    %21 = arith.mulf %11, %20 : vector<256x128xf32>
    %22 = vector.shape_cast %21 : vector<256x128xf32> to vector<4x8x8x128xf32>
    %cst_9 = arith.constant dense<0.000000e+00> : vector<8x8x128xf32>
    %23 = vector.multi_reduction <add>, %22, %cst_9 [0] : vector<4x8x8x128xf32> to vector<8x8x128xf32>
    %24 = arith.addf %3, %23 : vector<8x8x128xf32>
    %c0_10 = arith.constant 0 : index
    %c0_11 = arith.constant 0 : index
    %c0_12 = arith.constant 0 : index
    %25 = vector.load %arg5[%c0_10, %c0_11, %c0_12] : memref<8x8x128xf32, #tpu.memory_space<vmem>>, vector<8x8x128xf32>
    tpu.vector_store %arg5[%c0_10, %c0_11, %c0_12], %24 {strides = array<i32>} : memref<8x8x128xf32, #tpu.memory_space<vmem>>, vector<8x8x128xf32>,
    %c0_i32_13 = arith.constant 0 : i32
    %26 = arith.cmpi eq, %arg1, %c0_i32_13 : i32
    %27 = arith.extui %26 : i1 to i32
    %c0_i32_14 = arith.constant 0 : i32
    %28 = arith.cmpi ne, %27, %c0_i32_14 : i32
    scf.if %28 {
      %c0_15 = arith.constant 0 : index
      %c0_16 = arith.constant 0 : index
      %c0_17 = arith.constant 0 : index
      %29 = vector.load %arg5[%c0_15, %c0_16, %c0_17] : memref<8x8x128xf32, #tpu.memory_space<vmem>>, vector<8x8x128xf32>
      %30 = vector.shape_cast %29 : vector<8x8x128xf32> to vector<1x8x8x128xf32>
      %cst_18 = arith.constant dense<0.000000e+00> : vector<1xf32>
      %31 = vector.multi_reduction <add>, %30, %cst_18 [1, 2, 3] : vector<1x8x8x128xf32> to vector<1xf32>
      %32 = vector.shape_cast %31 : vector<1xf32> to vector<1x1x1x1xf32>
      %33 = vector.extract %32[0, 0, 0, 0] : f32 from vector<1x1x1x1xf32>
      %cst_19 = arith.constant 3.05175781E-5 : f32
      %34 = arith.mulf %33, %cst_19 : f32
      %35 = vector.broadcast %34 : f32 to vector<1x1xf32>
      %c0_20 = arith.constant 0 : index
      %c0_21 = arith.constant 0 : index
      %36 = vector.load %arg4[%c0_20, %c0_21] : memref<1x1xf32, #tpu.memory_space<vmem>>, vector<1x1xf32>
      tpu.vector_store %arg4[%c0_20, %c0_21], %35 {strides = array<i32>} : memref<1x1xf32, #tpu.memory_space<vmem>>, vector<1x1xf32>,
    } else {
    }
    return
  }
  func.func @transform_0(%arg0: i32, %arg1: i32) -> (i32, i32) {
    %c1_i32 = arith.constant 1 : i32
    %0 = arith.muli %arg0, %c1_i32 : i32
    %1 = arith.addi %0, %arg1 : i32
    %c0_i32 = arith.constant 0 : i32
    %2 = arith.minsi %1, %c0_i32 : i32
    %c0_i32_0 = arith.constant 0 : i32
    %c0_i32_1 = arith.constant 0 : i32
    return %2, %c0_i32_0 : i32, i32
  }
  func.func @transform_1(%arg0: i32, %arg1: i32) -> (i32, i32) {
    %c1_i32 = arith.constant 1 : i32
    %0 = arith.muli %arg0, %c1_i32 : i32
    %1 = arith.addi %0, %arg1 : i32
    %c0_i32 = arith.constant 0 : i32
    %2 = arith.minsi %1, %c0_i32 : i32
    %c0_i32_0 = arith.constant 0 : i32
    %c0_i32_1 = arith.constant 0 : i32
    return %2, %c0_i32_0 : i32, i32
  }
  func.func @transform_2(%arg0: i32, %arg1: i32) -> (i32, i32) {
    %c0_i32 = arith.constant 0 : i32
    %c0_i32_0 = arith.constant 0 : i32
    return %arg0, %c0_i32 : i32, i32
  }
}

</mosaic_0001>

<llo_original>
// kernel: tpu_custom_call.1
$region0: #{tpu_custom_call.1}
  #allocation0 [shape = 'u32[]', space=smem, size = 0x4, offset = 0x4, fixed_abs, tag = 'smem constant byte address 0x4 - core index']
  #allocation1 [shape = 'u32[144,128]{1,0:T(1,128)}', space=vmem, size = 0x12000, scoped, tag = 'internal scratch']
  #allocation2 [shape = 'f32[8,8,128]{2,1,0:T(8,128)}', space=vmem, size = 0x8000, scoped, tag = 'scratch operand']
  %s0 = inlined_call_operand.hbm [shape: f32[256,128], index: 0, kind: input, shape index: {}]
  %s1 = inlined_call_operand.hbm [shape: f32[256,128], index: 1, kind: input, shape index: {}]
  %s2 = inlined_call_operand.hbm [shape: f32[1,1], index: 2, kind: output, shape index: {}]
  %s3 = sld [smem:[#allocation0]]
  $region34: #{tpu_custom_call.1} parent=0
    _
  %s5 = ssub.s32 1, %s3
  %s6 = scalar_select 0, %s5, %s3
  $region1: #{tpu_custom_call.1} parent=0
    #allocation3 [shape = 'u8[131072]{0}', space=vmem, size = 0x20000, scoped, tag = 'input window, operand 0, single buffered']
    #allocation4 [shape = 's32[1]{0}', space=sflag, size = 0x4, scoped, tag = 'scoped memory for tpu_custom_call.1']
    #allocation5 [shape = 's32[1]{0}', space=sflag, size = 0x4, scoped, tag = 'scoped memory for tpu_custom_call.1']
    #allocation6 [shape = 'u8[131072]{0}', space=vmem, size = 0x20000, scoped, tag = 'input window, operand 1, single buffered']
    #allocation7 [shape = 's32[1]{0}', space=sflag, size = 0x4, scoped, tag = 'scoped memory for tpu_custom_call.1']
    #allocation8 [shape = 'u8[512]{0}', space=vmem, size = 0x400, scoped, tag = 'output window, operand 0, single buffered']
    %7 = vsyncpa [#allocation4], 0
    %8 = vsyncpa [#allocation7], 0
    %9 = vsyncpa [#allocation5], 0
    // Predicated region
    $region2: #{tpu_custom_call.1} parent=1 // pred_check
      _
    $region3: #{tpu_custom_call.1} parent=1 // pred_check_branch
      %11 = sbr.rel (0) target = $region5
    $region4: #{tpu_custom_call.1} parent=1 // pred_region
      %s12 = sadd.s32 0, 0
      %p13 = scmp.lt.s32.totalorder %s12, 0
      %s14 = scalar_select %p13, %s12, 0
      %s15 = smul.u32 32, %s14
      %s17 = ssub.s32 4096, 4096
      %18 = vsyncadd [#allocation4], %s17
      %s19 = smul.addr %s15, 128
      %s20 = scalar_lea.hbm %s0, %s19
      %s21 = sshll.u32 [#allocation3], 4
      %s22 = int_to_ptr.vmem [resolvable:$true] %s21
      %27 = dma.hbm_to_vmem [thread:$0]  %s20, 4096, %s22, [#allocation4], 128, 128, 8
    $region5: #{tpu_custom_call.1} parent=1 // pred_fallthru
      _
    // Predicated region
    $region6: #{tpu_custom_call.1} parent=1 // pred_check
      _
    $region7: #{tpu_custom_call.1} parent=1 // pred_check_branch
      %29 = sbr.rel (0) target = $region9
    $region8: #{tpu_custom_call.1} parent=1 // pred_region
      %s30 = sadd.s32 0, 0
      %p31 = scmp.lt.s32.totalorder %s30, 0
      %s32 = scalar_select %p31, %s30, 0
      %s33 = smul.u32 32, %s32
      %s35 = ssub.s32 4096, 4096
      %36 = vsyncadd [#allocation7], %s35
      %s37 = smul.addr %s33, 128
      %s38 = scalar_lea.hbm %s1, %s37
      %s39 = sshll.u32 [#allocation6], 4
      %s40 = int_to_ptr.vmem [resolvable:$true] %s39
      %45 = dma.hbm_to_vmem [thread:$0]  %s38, 4096, %s40, [#allocation7], 128, 128, 8
    $region9: #{tpu_custom_call.1} parent=1 // pred_fallthru
      _
    // Predicated region
    $region10: #{tpu_custom_call.1} parent=1 // pred_check
      _
    $region11: #{tpu_custom_call.1} parent=1 // pred_check_branch
      %47 = sbr.rel (0) target = $region13
    $region12: #{tpu_custom_call.1} parent=1 // pred_region
      %48 = dma.done [#allocation4], 4096
    $region13: #{tpu_custom_call.1} parent=1 // pred_fallthru
      _
    // Predicated region
    $region14: #{tpu_custom_call.1} parent=1 // pred_check
      _
    $region15: #{tpu_custom_call.1} parent=1 // pred_check_branch
      %50 = sbr.rel (0) target = $region17
    $region16: #{tpu_custom_call.1} parent=1 // pred_region
      %51 = dma.done [#allocation7], 4096
    $region17: #{tpu_custom_call.1} parent=1 // pred_fallthru
      _
    %s52 = sadd.s32 0, 0
    %p53 = scmp.lt.s32.totalorder %s52, 0
    %s54 = scalar_select %p53, %s52, 0
    %s55 = smul.u32 32, %s54
    %s56 = sadd.s32 0, 0
    %p57 = scmp.lt.s32.totalorder %s56, 0
    %s58 = scalar_select %p57, %s56, 0
    %s59 = smul.u32 32, %s58
    %p60 = scmp.eq.s32.totalorder 0, 0
    // Predicated region
    $region18: #{tpu_custom_call.1} parent=1 // pred_check
      %p61 = pneg %p60
    $region19: #{tpu_custom_call.1} parent=1 // pred_check_branch
      %63 = sbr.rel (%p61) target = $region21
    $region20: #{tpu_custom_call.1} parent=1 // pred_region
      %64 = vst [vmem:[#allocation2] sm:$0xff] 0.0
      %65 = vst [vmem:[#allocation2 + $0x8] sm:$0xff] 0.0
      %66 = vst [vmem:[#allocation2 + $0x10] sm:$0xff] 0.0
      %67 = vst [vmem:[#allocation2 + $0x18] sm:$0xff] 0.0
      %68 = vst [vmem:[#allocation2 + $0x20] sm:$0xff] 0.0
      %69 = vst [vmem:[#allocation2 + $0x28] sm:$0xff] 0.0
      %70 = vst [vmem:[#allocation2 + $0x30] sm:$0xff] 0.0
      %71 = vst [vmem:[#allocation2 + $0x38] sm:$0xff] 0.0
    $region21: #{tpu_custom_call.1} parent=1 // pred_fallthru
      _
    %v72 = vld [vmem:[#allocation2] sm:$0xff]
    %v73 = vld [vmem:[#allocation2 + $0x8] sm:$0xff]
    %v74 = vld [vmem:[#allocation2 + $0x10] sm:$0xff]
    %v75 = vld [vmem:[#allocation2 + $0x18] sm:$0xff]
    %v76 = vld [vmem:[#allocation2 + $0x20] sm:$0xff]
    %v77 = vld [vmem:[#allocation2 + $0x28] sm:$0xff]
    %v78 = vld [vmem:[#allocation2 + $0x30] sm:$0xff]
    %v79 = vld [vmem:[#allocation2 + $0x38] sm:$0xff]
    %v80 = vld [vmem:[#allocation3] sm:$0xff]
    %v81 = vld [vmem:[#allocation3 + $0x8] sm:$0xff]
    %v82 = vld [vmem:[#allocation3 + $0x10] sm:$0xff]
    %v83 = vld [vmem:[#allocation3 + $0x18] sm:$0xff]
    %v84 = vld [vmem:[#allocation3 + $0x20] sm:$0xff]
    %v85 = vld [vmem:[#allocation3 + $0x28] sm:$0xff]
    %v86 = vld [vmem:[#allocation3 + $0x30] sm:$0xff]
    %v87 = vld [vmem:[#allocation3 + $0x38] sm:$0xff]
    %v88 = vld [vmem:[#allocation3 + $0x40] sm:$0xff]
    %v89 = vld [vmem:[#allocation3 + $0x48] sm:$0xff]
    %v90 = vld [vmem:[#allocation3 + $0x50] sm:$0xff]
    %v91 = vld [vmem:[#allocation3 + $0x58] sm:$0xff]
    %v92 = vld [vmem:[#allocation3 + $0x60] sm:$0xff]
    %v93 = vld [vmem:[#allocation3 + $0x68] sm:$0xff]
    %v94 = vld [vmem:[#allocation3 + $0x70] sm:$0xff]
    %v95 = vld [vmem:[#allocation3 + $0x78] sm:$0xff]
    %v96 = vld [vmem:[#allocation3 + $0x80] sm:$0xff]
    %v97 = vld [vmem:[#allocation3 + $0x88] sm:$0xff]
    %v98 = vld [vmem:[#allocation3 + $0x90] sm:$0xff]
    %v99 = vld [vmem:[#allocation3 + $0x98] sm:$0xff]
    %v100 = vld [vmem:[#allocation3 + $0xa0] sm:$0xff]
    %v101 = vld [vmem:[#allocation3 + $0xa8] sm:$0xff]
    %v102 = vld [vmem:[#allocation3 + $0xb0] sm:$0xff]
    %v103 = vld [vmem:[#allocation3 + $0xb8] sm:$0xff]
    %v104 = vld [vmem:[#allocation3 + $0xc0] sm:$0xff]
    %v105 = vld [vmem:[#allocation3 + $0xc8] sm:$0xff]
    %v106 = vld [vmem:[#allocation3 + $0xd0] sm:$0xff]
    %v107 = vld [vmem:[#allocation3 + $0xd8] sm:$0xff]
    %v108 = vld [vmem:[#allocation3 + $0xe0] sm:$0xff]
    %v109 = vld [vmem:[#allocation3 + $0xe8] sm:$0xff]
    %v110 = vld [vmem:[#allocation3 + $0xf0] sm:$0xff]
    %v111 = vld [vmem:[#allocation3 + $0xf8] sm:$0xff]
    %v112 = vld [vmem:[#allocation6] sm:$0xff]
    %v113 = vld [vmem:[#allocation6 + $0x8] sm:$0xff]
    %v114 = vld [vmem:[#allocation6 + $0x10] sm:$0xff]
    %v115 = vld [vmem:[#allocation6 + $0x18] sm:$0xff]
    %v116 = vld [vmem:[#allocation6 + $0x20] sm:$0xff]
    %v117 = vld [vmem:[#allocation6 + $0x28] sm:$0xff]
    %v118 = vld [vmem:[#allocation6 + $0x30] sm:$0xff]
    %v119 = vld [vmem:[#allocation6 + $0x38] sm:$0xff]
    %v120 = vld [vmem:[#allocation6 + $0x40] sm:$0xff]
    %v121 = vld [vmem:[#allocation6 + $0x48] sm:$0xff]
    %v122 = vld [vmem:[#allocation6 + $0x50] sm:$0xff]
    %v123 = vld [vmem:[#allocation6 + $0x58] sm:$0xff]
    %v124 = vld [vmem:[#allocation6 + $0x60] sm:$0xff]
    %v125 = vld [vmem:[#allocation6 + $0x68] sm:$0xff]
    %v126 = vld [vmem:[#allocation6 + $0x70] sm:$0xff]
    %v127 = vld [vmem:[#allocation6 + $0x78] sm:$0xff]
    %v128 = vld [vmem:[#allocation6 + $0x80] sm:$0xff]
    %v129 = vld [vmem:[#allocation6 + $0x88] sm:$0xff]
    %v130 = vld [vmem:[#allocation6 + $0x90] sm:$0xff]
    %v131 = vld [vmem:[#allocation6 + $0x98] sm:$0xff]
    %v132 = vld [vmem:[#allocation6 + $0xa0] sm:$0xff]
    %v133 = vld [vmem:[#allocation6 + $0xa8] sm:$0xff]
    %v134 = vld [vmem:[#allocation6 + $0xb0] sm:$0xff]
    %v135 = vld [vmem:[#allocation6 + $0xb8] sm:$0xff]
    %v136 = vld [vmem:[#allocation6 + $0xc0] sm:$0xff]
    %v137 = vld [vmem:[#allocation6 + $0xc8] sm:$0xff]
    %v138 = vld [vmem:[#allocation6 + $0xd0] sm:$0xff]
    %v139 = vld [vmem:[#allocation6 + $0xd8] sm:$0xff]
    %v140 = vld [vmem:[#allocation6 + $0xe0] sm:$0xff]
    %v141 = vld [vmem:[#allocation6 + $0xe8] sm:$0xff]
    %v142 = vld [vmem:[#allocation6 + $0xf0] sm:$0xff]
    %v143 = vld [vmem:[#allocation6 + $0xf8] sm:$0xff]
    %v144 = vsub.f32 %v80, %v112
    %v145 = vsub.f32 %v81, %v113
    %v146 = vsub.f32 %v82, %v114
    %v147 = vsub.f32 %v83, %v115
    %v148 = vsub.f32 %v84, %v116
    %v149 = vsub.f32 %v85, %v117
    %v150 = vsub.f32 %v86, %v118
    %v151 = vsub.f32 %v87, %v119
    %v152 = vsub.f32 %v88, %v120
    %v153 = vsub.f32 %v89, %v121
    %v154 = vsub.f32 %v90, %v122
    %v155 = vsub.f32 %v91, %v123
    %v156 = vsub.f32 %v92, %v124
    %v157 = vsub.f32 %v93, %v125
    %v158 = vsub.f32 %v94, %v126
    %v159 = vsub.f32 %v95, %v127
    %v160 = vsub.f32 %v96, %v128
    %v161 = vsub.f32 %v97, %v129
    %v162 = vsub.f32 %v98, %v130
    %v163 = vsub.f32 %v99, %v131
    %v164 = vsub.f32 %v100, %v132
    %v165 = vsub.f32 %v101, %v133
    %v166 = vsub.f32 %v102, %v134
    %v167 = vsub.f32 %v103, %v135
    %v168 = vsub.f32 %v104, %v136
    %v169 = vsub.f32 %v105, %v137
    %v170 = vsub.f32 %v106, %v138
    %v171 = vsub.f32 %v107, %v139
    %v172 = vsub.f32 %v108, %v140
    %v173 = vsub.f32 %v109, %v141
    %v174 = vsub.f32 %v110, %v142
    %v175 = vsub.f32 %v111, %v143
    %v176 = vand.u32 2147483647, %v144
    %v177 = vand.u32 2147483647, %v145
    %v178 = vand.u32 2147483647, %v146
    %v179 = vand.u32 2147483647, %v147
    %v180 = vand.u32 2147483647, %v148
    %v181 = vand.u32 2147483647, %v149
    %v182 = vand.u32 2147483647, %v150
    %v183 = vand.u32 2147483647, %v151
    %v184 = vand.u32 2147483647, %v152
    %v185 = vand.u32 2147483647, %v153
    %v186 = vand.u32 2147483647, %v154
    %v187 = vand.u32 2147483647, %v155
    %v188 = vand.u32 2147483647, %v156
    %v189 = vand.u32 2147483647, %v157
    %v190 = vand.u32 2147483647, %v158
    %v191 = vand.u32 2147483647, %v159
    %v192 = vand.u32 2147483647, %v160
    %v193 = vand.u32 2147483647, %v161
    %v194 = vand.u32 2147483647, %v162
    %v195 = vand.u32 2147483647, %v163
    %v196 = vand.u32 2147483647, %v164
    %v197 = vand.u32 2147483647, %v165
    %v198 = vand.u32 2147483647, %v166
    %v199 = vand.u32 2147483647, %v167
    %v200 = vand.u32 2147483647, %v168
    %v201 = vand.u32 2147483647, %v169
    %v202 = vand.u32 2147483647, %v170
    %v203 = vand.u32 2147483647, %v171
    %v204 = vand.u32 2147483647, %v172
    %v205 = vand.u32 2147483647, %v173
    %v206 = vand.u32 2147483647, %v174
    %v207 = vand.u32 2147483647, %v175
    %v208 = vmul.f32 %v176, %v176
    %v209 = vmul.f32 %v177, %v177
    %v210 = vmul.f32 %v178, %v178
    %v211 = vmul.f32 %v179, %v179
    %v212 = vmul.f32 %v180, %v180
    %v213 = vmul.f32 %v181, %v181
    %v214 = vmul.f32 %v182, %v182
    %v215 = vmul.f32 %v183, %v183
    %v216 = vmul.f32 %v184, %v184
    %v217 = vmul.f32 %v185, %v185
    %v218 = vmul.f32 %v186, %v186
    %v219 = vmul.f32 %v187, %v187
    %v220 = vmul.f32 %v188, %v188
    %v221 = vmul.f32 %v189, %v189
    %v222 = vmul.f32 %v190, %v190
    %v223 = vmul.f32 %v191, %v191
    %v224 = vmul.f32 %v192, %v192
    %v225 = vmul.f32 %v193, %v193
    %v226 = vmul.f32 %v194, %v194
    %v227 = vmul.f32 %v195, %v195
    %v228 = vmul.f32 %v196, %v196
    %v229 = vmul.f32 %v197, %v197
    %v230 = vmul.f32 %v198, %v198
    %v231 = vmul.f32 %v199, %v199
    %v232 = vmul.f32 %v200, %v200
    %v233 = vmul.f32 %v201, %v201
    %v234 = vmul.f32 %v202, %v202
    %v235 = vmul.f32 %v203, %v203
    %v236 = vmul.f32 %v204, %v204
    %v237 = vmul.f32 %v205, %v205
    %v238 = vmul.f32 %v206, %v206
    %v239 = vmul.f32 %v207, %v207
    %v240 = vsub.f32 %v176, 0.2
    %v241 = vsub.f32 %v177, 0.2
    %v242 = vsub.f32 %v178, 0.2
    %v243 = vsub.f32 %v179, 0.2
    %v244 = vsub.f32 %v180, 0.2
    %v245 = vsub.f32 %v181, 0.2
    %v246 = vsub.f32 %v182, 0.2
    %v247 = vsub.f32 %v183, 0.2
    %v248 = vsub.f32 %v184, 0.2
    %v249 = vsub.f32 %v185, 0.2
    %v250 = vsub.f32 %v186, 0.2
    %v251 = vsub.f32 %v187, 0.2
    %v252 = vsub.f32 %v188, 0.2
    %v253 = vsub.f32 %v189, 0.2
    %v254 = vsub.f32 %v190, 0.2
    %v255 = vsub.f32 %v191, 0.2
    %v256 = vsub.f32 %v192, 0.2
    %v257 = vsub.f32 %v193, 0.2
    %v258 = vsub.f32 %v194, 0.2
    %v259 = vsub.f32 %v195, 0.2
    %v260 = vsub.f32 %v196, 0.2
    %v261 = vsub.f32 %v197, 0.2
    %v262 = vsub.f32 %v198, 0.2
    %v263 = vsub.f32 %v199, 0.2
    %v264 = vsub.f32 %v200, 0.2
    %v265 = vsub.f32 %v201, 0.2
    %v266 = vsub.f32 %v202, 0.2
    %v267 = vsub.f32 %v203, 0.2
    %v268 = vsub.f32 %v204, 0.2
    %v269 = vsub.f32 %v205, 0.2
    %v270 = vsub.f32 %v206, 0.2
    %v271 = vsub.f32 %v207, 0.2
    %v272 = vmul.f32 %v240, 5.0
    %v273 = vmul.f32 %v241, 5.0
    %v274 = vmul.f32 %v242, 5.0
    %v275 = vmul.f32 %v243, 5.0
    %v276 = vmul.f32 %v244, 5.0
    %v277 = vmul.f32 %v245, 5.0
    %v278 = vmul.f32 %v246, 5.0
    %v279 = vmul.f32 %v247, 5.0
    %v280 = vmul.f32 %v248, 5.0
    %v281 = vmul.f32 %v249, 5.0
    %v282 = vmul.f32 %v250, 5.0
    %v283 = vmul.f32 %v251, 5.0
    %v284 = vmul.f32 %v252, 5.0
    %v285 = vmul.f32 %v253, 5.0
    %v286 = vmul.f32 %v254, 5.0
    %v287 = vmul.f32 %v255, 5.0
    %v288 = vmul.f32 %v256, 5.0
    %v289 = vmul.f32 %v257, 5.0
    %v290 = vmul.f32 %v258, 5.0
    %v291 = vmul.f32 %v259, 5.0
    %v292 = vmul.f32 %v260, 5.0
    %v293 = vmul.f32 %v261, 5.0
    %v294 = vmul.f32 %v262, 5.0
    %v295 = vmul.f32 %v263, 5.0
    %v296 = vmul.f32 %v264, 5.0
    %v297 = vmul.f32 %v265, 5.0
    %v298 = vmul.f32 %v266, 5.0
    %v299 = vmul.f32 %v267, 5.0
    %v300 = vmul.f32 %v268, 5.0
    %v301 = vmul.f32 %v269, 5.0
    %v302 = vmul.f32 %v270, 5.0
    %v303 = vmul.f32 %v271, 5.0
    %v304 = vtanh.pop %v272
    %v305 = vtanh.pop %v273
    %v306 = vtanh.pop %v274
    %v307 = vtanh.pop %v275
    %v308 = vtanh.pop %v276
    %v309 = vtanh.pop %v277
    %v310 = vtanh.pop %v278
    %v311 = vtanh.pop %v279
    %v312 = vtanh.pop %v280
    %v313 = vtanh.pop %v281
    %v314 = vtanh.pop %v282
    %v315 = vtanh.pop %v283
    %v316 = vtanh.pop %v284
    %v317 = vtanh.pop %v285
    %v318 = vtanh.pop %v286
    %v319 = vtanh.pop %v287
    %v320 = vtanh.pop %v288
    %v321 = vtanh.pop %v289
    %v322 = vtanh.pop %v290
    %v323 = vtanh.pop %v291
    %v324 = vtanh.pop %v292
    %v325 = vtanh.pop %v293
    %v326 = vtanh.pop %v294
    %v327 = vtanh.pop %v295
    %v328 = vtanh.pop %v296
    %v329 = vtanh.pop %v297
    %v330 = vtanh.pop %v298
    %v331 = vtanh.pop %v299
    %v332 = vtanh.pop %v300
    %v333 = vtanh.pop %v301
    %v334 = vtanh.pop %v302
    %v335 = vtanh.pop %v303
    %v336 = vmul.f32 %v304, 0.5
    %v337 = vmul.f32 %v305, 0.5
    %v338 = vmul.f32 %v306, 0.5
    %v339 = vmul.f32 %v307, 0.5
    %v340 = vmul.f32 %v308, 0.5
    %v341 = vmul.f32 %v309, 0.5
    %v342 = vmul.f32 %v310, 0.5
    %v343 = vmul.f32 %v311, 0.5
    %v344 = vmul.f32 %v312, 0.5
    %v345 = vmul.f32 %v313, 0.5
    %v346 = vmul.f32 %v314, 0.5
    %v347 = vmul.f32 %v315, 0.5
    %v348 = vmul.f32 %v316, 0.5
    %v349 = vmul.f32 %v317, 0.5
    %v350 = vmul.f32 %v318, 0.5
    %v351 = vmul.f32 %v319, 0.5
    %v352 = vmul.f32 %v320, 0.5
    %v353 = vmul.f32 %v321, 0.5
    %v354 = vmul.f32 %v322, 0.5
    %v355 = vmul.f32 %v323, 0.5
    %v356 = vmul.f32 %v324, 0.5
    %v357 = vmul.f32 %v325, 0.5
    %v358 = vmul.f32 %v326, 0.5
    %v359 = vmul.f32 %v327, 0.5
    %v360 = vmul.f32 %v328, 0.5
    %v361 = vmul.f32 %v329, 0.5
    %v362 = vmul.f32 %v330, 0.5
    %v363 = vmul.f32 %v331, 0.5
    %v364 = vmul.f32 %v332, 0.5
    %v365 = vmul.f32 %v333, 0.5
    %v366 = vmul.f32 %v334, 0.5
    %v367 = vmul.f32 %v335, 0.5
    %v368 = vadd.f32 %v336, 0.5
    %v369 = vadd.f32 %v337, 0.5
    %v370 = vadd.f32 %v338, 0.5
    %v371 = vadd.f32 %v339, 0.5
    %v372 = vadd.f32 %v340, 0.5
    %v373 = vadd.f32 %v341, 0.5
    %v374 = vadd.f32 %v342, 0.5
    %v375 = vadd.f32 %v343, 0.5
    %v376 = vadd.f32 %v344, 0.5
    %v377 = vadd.f32 %v345, 0.5
    %v378 = vadd.f32 %v346, 0.5
    %v379 = vadd.f32 %v347, 0.5
    %v380 = vadd.f32 %v348, 0.5
    %v381 = vadd.f32 %v349, 0.5
    %v382 = vadd.f32 %v350, 0.5
    %v383 = vadd.f32 %v351, 0.5
    %v384 = vadd.f32 %v352, 0.5
    %v385 = vadd.f32 %v353, 0.5
    %v386 = vadd.f32 %v354, 0.5
    %v387 = vadd.f32 %v355, 0.5
    %v388 = vadd.f32 %v356, 0.5
    %v389 = vadd.f32 %v357, 0.5
    %v390 = vadd.f32 %v358, 0.5
    %v391 = vadd.f32 %v359, 0.5
    %v392 = vadd.f32 %v360, 0.5
    %v393 = vadd.f32 %v361, 0.5
    %v394 = vadd.f32 %v362, 0.5
    %v395 = vadd.f32 %v363, 0.5
    %v396 = vadd.f32 %v364, 0.5
    %v397 = vadd.f32 %v365, 0.5
    %v398 = vadd.f32 %v366, 0.5
    %v399 = vadd.f32 %v367, 0.5
    %v400 = vmul.f32 %v208, %v368
    %v401 = vmul.f32 %v209, %v369
    %v402 = vmul.f32 %v210, %v370
    %v403 = vmul.f32 %v211, %v371
    %v404 = vmul.f32 %v212, %v372
    %v405 = vmul.f32 %v213, %v373
    %v406 = vmul.f32 %v214, %v374
    %v407 = vmul.f32 %v215, %v375
    %v408 = vmul.f32 %v216, %v376
    %v409 = vmul.f32 %v217, %v377
    %v410 = vmul.f32 %v218, %v378
    %v411 = vmul.f32 %v219, %v379
    %v412 = vmul.f32 %v220, %v380
    %v413 = vmul.f32 %v221, %v381
    %v414 = vmul.f32 %v222, %v382
    %v415 = vmul.f32 %v223, %v383
    %v416 = vmul.f32 %v224, %v384
    %v417 = vmul.f32 %v225, %v385
    %v418 = vmul.f32 %v226, %v386
    %v419 = vmul.f32 %v227, %v387
    %v420 = vmul.f32 %v228, %v388
    %v421 = vmul.f32 %v229, %v389
    %v422 = vmul.f32 %v230, %v390
    %v423 = vmul.f32 %v231, %v391
    %v424 = vmul.f32 %v232, %v392
    %v425 = vmul.f32 %v233, %v393
    %v426 = vmul.f32 %v234, %v394
    %v427 = vmul.f32 %v235, %v395
    %v428 = vmul.f32 %v236, %v396
    %v429 = vmul.f32 %v237, %v397
    %v430 = vmul.f32 %v238, %v398
    %v431 = vmul.f32 %v239, %v399
    %v432 = vadd.f32 %v400, %v408
    %v433 = vadd.f32 %v432, %v416
    %v434 = vadd.f32 %v433, %v424
    %v435 = vadd.f32 %v401, %v409
    %v436 = vadd.f32 %v435, %v417
    %v437 = vadd.f32 %v436, %v425
    %v438 = vadd.f32 %v402, %v410
    %v439 = vadd.f32 %v438, %v418
    %v440 = vadd.f32 %v439, %v426
    %v441 = vadd.f32 %v403, %v411
    %v442 = vadd.f32 %v441, %v419
    %v443 = vadd.f32 %v442, %v427
    %v444 = vadd.f32 %v404, %v412
    %v445 = vadd.f32 %v444, %v420
    %v446 = vadd.f32 %v445, %v428
    %v447 = vadd.f32 %v405, %v413
    %v448 = vadd.f32 %v447, %v421
    %v449 = vadd.f32 %v448, %v429
    %v450 = vadd.f32 %v406, %v414
    %v451 = vadd.f32 %v450, %v422
    %v452 = vadd.f32 %v451, %v430
    %v453 = vadd.f32 %v407, %v415
    %v454 = vadd.f32 %v453, %v423
    %v455 = vadd.f32 %v454, %v431
    %v456 = vadd.f32 %v72, %v434
    %v457 = vadd.f32 %v73, %v437
    %v458 = vadd.f32 %v74, %v440
    %v459 = vadd.f32 %v75, %v443
    %v460 = vadd.f32 %v76, %v446
    %v461 = vadd.f32 %v77, %v449
    %v462 = vadd.f32 %v78, %v452
    %v463 = vadd.f32 %v79, %v455
    %464 = vst [vmem:[#allocation2] sm:$0xff] %v456
    %465 = vst [vmem:[#allocation2 + $0x8] sm:$0xff] %v457
    %466 = vst [vmem:[#allocation2 + $0x10] sm:$0xff] %v458
    %467 = vst [vmem:[#allocation2 + $0x18] sm:$0xff] %v459
    %468 = vst [vmem:[#allocation2 + $0x20] sm:$0xff] %v460
    %469 = vst [vmem:[#allocation2 + $0x28] sm:$0xff] %v461
    %470 = vst [vmem:[#allocation2 + $0x30] sm:$0xff] %v462
    %471 = vst [vmem:[#allocation2 + $0x38] sm:$0xff] %v463
    // Predicated region
    $region22: #{tpu_custom_call.1} parent=1 // pred_check
      %p472 = pneg %p60
    $region23: #{tpu_custom_call.1} parent=1 // pred_check_branch
      %474 = sbr.rel (%p472) target = $region25
    $region24: #{tpu_custom_call.1} parent=1 // pred_region
      %v475 = vld [vmem:[#allocation2] sm:$0xff]
      %v476 = vld [vmem:[#allocation2 + $0x8] sm:$0xff]
      %v477 = vld [vmem:[#allocation2 + $0x10] sm:$0xff]
      %v478 = vld [vmem:[#allocation2 + $0x18] sm:$0xff]
      %v479 = vld [vmem:[#allocation2 + $0x20] sm:$0xff]
      %v480 = vld [vmem:[#allocation2 + $0x28] sm:$0xff]
      %v481 = vld [vmem:[#allocation2 + $0x30] sm:$0xff]
      %v482 = vld [vmem:[#allocation2 + $0x38] sm:$0xff]
      %v483 = vadd.f32 %v475, %v476
      %v484 = vadd.f32 %v483, %v477
      %v485 = vadd.f32 %v484, %v478
      %v486 = vadd.f32 %v485, %v479
      %v487 = vadd.f32 %v486, %v480
      %v488 = vadd.f32 %v487, %v481
      %v489 = vadd.f32 %v488, %v482
      %490 = vadd.xlane.f32.xlu0 %v489
      %v491 = vpop.xlane.xlu0 %490
      %v492 = vrot.slane %v491, 4
      %v493 = vadd.f32 %v491, %v492
      %v494 = vrot.slane %v493, 2
      %v495 = vadd.f32 %v493, %v494
      %v496 = vrot.slane %v495, 1
      %v497 = vadd.f32 %v495, %v496
      %s498 = vtos %v497
      %s499 = smul.f32 %s498, 3.0517578e-05
      %v500 = vstv %s499
      %vm501 = vcmask 0
      %502 = vst.msk [vmem:[#allocation8] sm:$0x1] %vm501, %v500
    $region25: #{tpu_custom_call.1} parent=1 // pred_fallthru
      _
    // Predicated region
    $region26: #{tpu_custom_call.1} parent=1 // pred_check
      _
    $region27: #{tpu_custom_call.1} parent=1 // pred_check_branch
      %504 = sbr.rel (0) target = $region29
    $region28: #{tpu_custom_call.1} parent=1 // pred_region
      %s506 = ssub.s32 16, 16
      %507 = vsyncadd [#allocation5], %s506
      %s509 = sshll.u32 [#allocation8], 4
      %s510 = int_to_ptr.vmem [resolvable:$true] %s509
      %512 = dma.vmem_to_hbm [thread:$0]  %s510, 16, %s2, [#allocation5]
    $region29: #{tpu_custom_call.1} parent=1 // pred_fallthru
      _
    // Predicated region
    $region30: #{tpu_custom_call.1} parent=1 // pred_check
      _
    $region31: #{tpu_custom_call.1} parent=1 // pred_check_branch
      %514 = sbr.rel (0) target = $region33
    $region32: #{tpu_custom_call.1} parent=1 // pred_region
      %515 = dma.done [#allocation5], 16
    $region33: #{tpu_custom_call.1} parent=1 // pred_fallthru
      _
    %516 = vsyncpa [#allocation4], 1
    %517 = vsyncpa [#allocation7], 1
    %518 = vsyncpa [#allocation5], 1

</llo_original>
